<compile_context>
chip_gen: v7x
topology: tpu7x:2x2x1
jax: 0.10.0
libtpu: 0.0.40
codegen_flags: <defaults>
</compile_context>

<pallas_src>
import functools

import jax
import jax.numpy as jnp
from jax.experimental import pallas as pl
from jax.experimental.pallas import tpu as pltpu

H_PAD = 256          # hidden width padded from 200 to 2 full vregs of sublanes


def _round_up(n, m):
    return ((n + m - 1) // m) * m


def policy_net_kernel(x_ref, w1_ref, b1_ref, w2_ref, b2_ref, out_ref):
    """Batch-on-lanes layout.

    x_ref : (F, TB)    input, batch on lanes
    w1_ref: (Hp, F)    Linear1 weight (torch (out, in) layout, hidden-padded)
    b1_ref: (Hp, 1)    Linear1 bias column
    w2_ref: (Hp, 1)    Linear2 weight column
    b2_ref: (1,)       Linear2 bias scalar (SMEM)
    out_ref:(2, TB)    row 0 = mu, row 1 = sigma
    """
    x = x_ref[...]                           # (F, TB)
    w1 = w1_ref[...]                         # (Hp, F)

    # Hidden layer: Linear(F -> Hp) + ReLU as F=3 broadcast-FMAs on the VPU.
    # Each term: lane-broadcast of a W1 column * sublane-broadcast of an x row.
    h = b1_ref[...]                          # (Hp, 1), broadcasts on first FMA
    for k in range(x.shape[0]):              # static, unrolled at trace time
        h = h + w1[:, k:k + 1] * x[k:k + 1, :]
    h = jnp.maximum(h, 0.0)                  # (Hp, TB)

    # Output layer: Linear(Hp -> 1) as VPU multiply + cross-sublane reduction.
    z = jnp.sum(h * w2_ref[...], axis=0, keepdims=True) + b2_ref[0]  # (1, TB)

    mu = jnp.tanh(z)                         # Tanh head
    sigma = jax.nn.softplus(z)               # Softplus head

    out_ref[0:1, :] = mu
    out_ref[1:2, :] = sigma


@functools.partial(jax.jit, static_argnames=("block_b",))
def policy_net_forward(x, w1_t, b1_col, w2_col, b2, *, block_b=1024):
    """x:(B,F), w1_t:(Hp,F), b1_col:(Hp,1), w2_col:(Hp,1), b2:(1,)
       -> (mu, sigma), each (B, 1)."""
    B, F = x.shape
    Hp = w1_t.shape[0]

    # Batch lives on the lane axis: keep it 128-aligned.
    Bp = _round_up(B, 128)
    TB = min(block_b, Bp)
    # v7x has 2 TensorCores: once the batch is big enough to split, make sure
    # the "parallel" grid has at least 2 steps.
    if Bp > 512:
        TB = min(TB, _round_up(pl.cdiv(Bp, 2), 128))
    Bp = _round_up(Bp, TB)
    grid = (Bp // TB,)

    # Lane-dense x: (F, Bp), zero-padded along batch.
    x_t = jnp.zeros((F, Bp), x.dtype).at[:, :B].set(x.T)

    flops = 2 * Bp * (F * Hp + Hp)
    transcendentals = 3 * Bp                          # tanh + exp + log1p
    bytes_accessed = 4 * (F * Bp + Hp * F + Hp + Hp + 1 + 2 * Bp)

    out = pl.pallas_call(
        policy_net_kernel,
        grid=grid,
        in_specs=[
            pl.BlockSpec((F, TB), lambda i: (0, i)),             # x (batch-tiled)
            pl.BlockSpec((Hp, F), lambda i: (0, 0)),             # W1 (replicated)
            pl.BlockSpec((Hp, 1), lambda i: (0, 0)),             # b1 (replicated)
            pl.BlockSpec((Hp, 1), lambda i: (0, 0)),             # W2 (replicated)
            pl.BlockSpec(memory_space=pltpu.MemorySpace.SMEM),   # b2 scalar
        ],
        out_specs=pl.BlockSpec((2, TB), lambda i: (0, i)),
        out_shape=jax.ShapeDtypeStruct((2, Bp), jnp.float32),
        compiler_params=pltpu.CompilerParams(
            dimension_semantics=("parallel",),
        ),
        cost_estimate=pl.CostEstimate(
            flops=flops,
            transcendentals=transcendentals,
            bytes_accessed=bytes_accessed,
        ),
    )(x_t, w1_t, b1_col, w2_col, b2)

    mu = out[0, :B].reshape(B, 1)
    sigma = out[1, :B].reshape(B, 1)
    return mu, sigma


def init_params(key, n_features, n_hidden=200, n_actions=1, pad_hidden_to=H_PAD):
    """Deterministic init matching PolicyNet.__init__ (weights ~ N(0, 0.1),
       biases = 0.1), zero-padded along the hidden axis to `pad_hidden_to`,
       stored in the kernel's batch-on-lanes layout."""
    assert n_actions == 1
    k1, k2 = jax.random.split(key)
    w1 = (0.1 * jax.random.normal(k1, (n_hidden, n_features))).astype(jnp.float32)
    b1 = jnp.full((n_hidden,), 0.1, dtype=jnp.float32)
    w2 = (0.1 * jax.random.normal(k2, (n_hidden,))).astype(jnp.float32)
    b2 = jnp.full((1,), 0.1, dtype=jnp.float32)

    Hp = pad_hidden_to
    # Zero padding keeps relu(W1 x + b1) contributions through W2 exactly zero.
    w1_t = jnp.zeros((Hp, n_features), jnp.float32).at[:n_hidden, :].set(w1)
    b1_col = jnp.zeros((Hp, 1), jnp.float32).at[:n_hidden, 0].set(b1)
    w2_col = jnp.zeros((Hp, 1), jnp.float32).at[:n_hidden, 0].set(w2)
    return w1_t, b1_col, w2_col, b2


def reference_forward(x, w1_t, b1_col, w2_col, b2):
    h = jnp.maximum(x @ w1_t.T + b1_col[:, 0], 0.0)   # (B, Hp)
    z = h @ w2_col + b2                                # (B, 1)
    return jnp.tanh(z), jax.nn.softplus(z)


if __name__ == "__main__":
    key = jax.random.PRNGKey(0)
    k_x, k_p = jax.random.split(key)

    B = 8    # batch
    F = 3    # Pendulum-v1 observation dim (cos th, sin th, th_dot)
    A = 1    # n_actions

    x = jax.random.normal(k_x, (B, F), dtype=jnp.float32)
    w1_t, b1_col, w2_col, b2 = init_params(k_p, F, n_hidden=200, n_actions=A)

    mu, sigma = policy_net_forward(x, w1_t, b1_col, w2_col, b2)
    jax.block_until_ready((mu, sigma))

    # sanity check against pure-JAX reference
    mu_ref, sigma_ref = reference_forward(x, w1_t, b1_col, w2_col, b2)
    assert mu.shape == (B, A) and sigma.shape == (B, A)
    assert jnp.allclose(mu, mu_ref, atol=1e-5, rtol=1e-5)
    assert jnp.allclose(sigma, sigma_ref, atol=1e-5, rtol=1e-5)

    print("KERNEL_OK")
</pallas_src>

<mosaic_0001>
module attributes {stable_mosaic.version = 11 : i64} {
  func.func @policy_net_kernel(%arg0: i32, %arg1: memref<3x128xf32, #tpu.memory_space<vmem>>, %arg2: memref<256x3xf32, #tpu.memory_space<vmem>>, %arg3: memref<256x1xf32, #tpu.memory_space<vmem>>, %arg4: memref<256x1xf32, #tpu.memory_space<vmem>>, %arg5: memref<1xf32, #tpu.memory_space<smem>>, %arg6: memref<2x128xf32, #tpu.memory_space<vmem>>) attributes {dimension_semantics = [#tpu.dimension_semantics<parallel>], iteration_bounds = array<i64: 1>, scalar_prefetch = 0 : i64, scratch_operands = 0 : i64, tpu.core_type = #tpu.core_type<tc>, window_params = [{transform_indices = @transform_0, window_bounds = array<i64: 3, 128>}, {pipeline_mode = #tpu.pipeline_mode<synchronous>, transform_indices = @transform_1, window_bounds = array<i64: 256, 3>}, {pipeline_mode = #tpu.pipeline_mode<synchronous>, transform_indices = @transform_2, window_bounds = array<i64: 256, 1>}, {pipeline_mode = #tpu.pipeline_mode<synchronous>, transform_indices = @transform_3, window_bounds = array<i64: 256, 1>}, {transform_indices = @transform_4, window_bounds = array<i64: 1>}, {transform_indices = @transform_5, window_bounds = array<i64: 2, 128>}]} {
    %c0 = arith.constant 0 : index
    %c0_0 = arith.constant 0 : index
    %0 = vector.load %arg1[%c0, %c0_0] : memref<3x128xf32, #tpu.memory_space<vmem>>, vector<3x128xf32>
    %c0_1 = arith.constant 0 : index
    %c0_2 = arith.constant 0 : index
    %1 = vector.load %arg2[%c0_1, %c0_2] : memref<256x3xf32, #tpu.memory_space<vmem>>, vector<256x3xf32>
    %c0_3 = arith.constant 0 : index
    %c0_4 = arith.constant 0 : index
    %2 = vector.load %arg3[%c0_3, %c0_4] : memref<256x1xf32, #tpu.memory_space<vmem>>, vector<256x1xf32>
    %3 = vector.extract_strided_slice %1 {offsets = [0, 0], sizes = [256, 1], strides = [1, 1]} : vector<256x3xf32> to vector<256x1xf32>
    %4 = vector.extract_strided_slice %0 {offsets = [0, 0], sizes = [1, 128], strides = [1, 1]} : vector<3x128xf32> to vector<1x128xf32>
    %5 = vector.broadcast %3 : vector<256x1xf32> to vector<256x128xf32>
    %6 = vector.broadcast %4 : vector<1x128xf32> to vector<256x128xf32>
    %7 = arith.mulf %5, %6 : vector<256x128xf32>
    %8 = vector.broadcast %2 : vector<256x1xf32> to vector<256x128xf32>
    %9 = arith.addf %8, %7 : vector<256x128xf32>
    %10 = vector.extract_strided_slice %1 {offsets = [0, 1], sizes = [256, 1], strides = [1, 1]} : vector<256x3xf32> to vector<256x1xf32>
    %11 = vector.extract_strided_slice %0 {offsets = [1, 0], sizes = [1, 128], strides = [1, 1]} : vector<3x128xf32> to vector<1x128xf32>
    %12 = vector.broadcast %10 : vector<256x1xf32> to vector<256x128xf32>
    %13 = vector.broadcast %11 : vector<1x128xf32> to vector<256x128xf32>
    %14 = arith.mulf %12, %13 : vector<256x128xf32>
    %15 = arith.addf %9, %14 : vector<256x128xf32>
    %16 = vector.extract_strided_slice %1 {offsets = [0, 2], sizes = [256, 1], strides = [1, 1]} : vector<256x3xf32> to vector<256x1xf32>
    %17 = vector.extract_strided_slice %0 {offsets = [2, 0], sizes = [1, 128], strides = [1, 1]} : vector<3x128xf32> to vector<1x128xf32>
    %18 = vector.broadcast %16 : vector<256x1xf32> to vector<256x128xf32>
    %19 = vector.broadcast %17 : vector<1x128xf32> to vector<256x128xf32>
    %20 = arith.mulf %18, %19 : vector<256x128xf32>
    %21 = arith.addf %15, %20 : vector<256x128xf32>
    %cst = arith.constant 0.000000e+00 : f32
    %22 = vector.broadcast %cst : f32 to vector<256x128xf32>
    %23 = arith.maximumf %21, %22 : vector<256x128xf32>
    %c0_5 = arith.constant 0 : index
    %c0_6 = arith.constant 0 : index
    %24 = vector.load %arg4[%c0_5, %c0_6] : memref<256x1xf32, #tpu.memory_space<vmem>>, vector<256x1xf32>
    %25 = vector.broadcast %24 : vector<256x1xf32> to vector<256x128xf32>
    %26 = arith.mulf %23, %25 : vector<256x128xf32>
    %cst_7 = arith.constant dense<0.000000e+00> : vector<128xf32>
    %27 = vector.multi_reduction <add>, %26, %cst_7 [0] : vector<256x128xf32> to vector<128xf32>
    %28 = vector.shape_cast %27 : vector<128xf32> to vector<1x128xf32>
    %c0_8 = arith.constant 0 : index
    %29 = memref.load %arg5[%c0_8] : memref<1xf32, #tpu.memory_space<smem>>
    %30 = vector.broadcast %29 : f32 to vector<1x128xf32>
    %31 = arith.addf %28, %30 : vector<1x128xf32>
    %32 = math.tanh %31 : vector<1x128xf32>
    %cst_9 = arith.constant 0.000000e+00 : f32
    %33 = vector.broadcast %cst_9 : f32 to vector<1x128xf32>
    %34 = arith.maximumf %31, %33 : vector<1x128xf32>
    %35 = vector.broadcast %cst_9 : f32 to vector<1x128xf32>
    %36 = arith.subf %31, %35 : vector<1x128xf32>
    %37 = arith.cmpf one, %36, %36 : vector<1x128xf32>
    %38 = vector.broadcast %cst_9 : f32 to vector<1x128xf32>
    %39 = arith.addf %31, %38 : vector<1x128xf32>
    %40 = math.absf %36 : vector<1x128xf32>
    %cst_10 = arith.constant 0.000000e+00 : f32
    %41 = vector.broadcast %cst_10 : f32 to vector<1x128xf32>
    %42 = arith.subf %41, %40 : vector<1x128xf32>
    %43 = math.exp %42 : vector<1x128xf32>
    %44 = math.log1p %43 : vector<1x128xf32>
    %45 = arith.addf %34, %44 : vector<1x128xf32>
    %46 = arith.select %37, %39, %45 : vector<1x128xi1>, vector<1x128xf32>
    %c0_11 = arith.constant 0 : index
    %c0_12 = arith.constant 0 : index
    %47 = vector.load %arg6[%c0_11, %c0_12] : memref<2x128xf32, #tpu.memory_space<vmem>>, vector<1x128xf32>
    tpu.vector_store %arg6[%c0_11, %c0_12], %32 {strides = array<i32>} : memref<2x128xf32, #tpu.memory_space<vmem>>, vector<1x128xf32>,
    %c1 = arith.constant 1 : index
    %c0_13 = arith.constant 0 : index
    %48 = vector.load %arg6[%c1, %c0_13] : memref<2x128xf32, #tpu.memory_space<vmem>>, vector<1x128xf32>
    tpu.vector_store %arg6[%c1, %c0_13], %46 {strides = array<i32>} : memref<2x128xf32, #tpu.memory_space<vmem>>, vector<1x128xf32>,
    return
  }
  func.func @transform_0(%arg0: i32) -> (i32, i32) {
    %c0_i32 = arith.constant 0 : i32
    %c0_i32_0 = arith.constant 0 : i32
    return %c0_i32, %arg0 : i32, i32
  }
  func.func @transform_1(%arg0: i32) -> (i32, i32) {
    %c0_i32 = arith.constant 0 : i32
    %c0_i32_0 = arith.constant 0 : i32
    %c0_i32_1 = arith.constant 0 : i32
    return %c0_i32, %c0_i32_0 : i32, i32
  }
  func.func @transform_2(%arg0: i32) -> (i32, i32) {
    %c0_i32 = arith.constant 0 : i32
    %c0_i32_0 = arith.constant 0 : i32
    %c0_i32_1 = arith.constant 0 : i32
    return %c0_i32, %c0_i32_0 : i32, i32
  }
  func.func @transform_3(%arg0: i32) -> (i32, i32) {
    %c0_i32 = arith.constant 0 : i32
    %c0_i32_0 = arith.constant 0 : i32
    %c0_i32_1 = arith.constant 0 : i32
    return %c0_i32, %c0_i32_0 : i32, i32
  }
  func.func @transform_4(%arg0: i32) -> i32 {
    %c0_i32 = arith.constant 0 : i32
    %c0_i32_0 = arith.constant 0 : i32
    return %c0_i32 : i32
  }
  func.func @transform_5(%arg0: i32) -> (i32, i32) {
    %c0_i32 = arith.constant 0 : i32
    %c0_i32_0 = arith.constant 0 : i32
    return %c0_i32, %arg0 : i32, i32
  }
}

</mosaic_0001>

<llo_original>
// kernel: policy_net_forward.1
$region0: #{policy_net_forward.1}
  #allocation0 [shape = 'u32[]', space=smem, size = 0x4, offset = 0x4, fixed_abs, tag = 'smem constant byte address 0x4 - core index']
  #allocation1 [shape = 'u32[144,128]{1,0:T(1,128)}', space=vmem, size = 0x12000, scoped, tag = 'internal scratch']
  #allocation2 [shape = 'f32[1]{0:T(128)S(6)}', space=smem, size = 0x200, scoped, tag = 'scoped memory for policy_net_forward.1']
  %s0 = inlined_call_operand.vmem [shape: f32[3,128], index: 0, kind: input, shape index: {}]
  %s1 = inlined_call_operand.vmem [shape: f32[256,3], index: 1, kind: input, shape index: {}]
  %s2 = inlined_call_operand.vmem [shape: f32[256,1], index: 2, kind: input, shape index: {}]
  %s3 = inlined_call_operand.vmem [shape: f32[256,1], index: 3, kind: input, shape index: {}]
  %s4 = inlined_call_operand.<no memory space> [shape: f32[1], index: 4, kind: input, shape index: {}]
  %s5 = inlined_call_operand.vmem [shape: f32[2,128], index: 5, kind: output, shape index: {}]
  %s6 = sld [smem:[#allocation0]]
  $region30: #{policy_net_forward.1} parent=0
    _
  %s8 = ssub.s32 1, %s6
  %s9 = scalar_select 0, %s8, %s6
  %10 = sst [smem:[#allocation2]] %s4
  // Predicated region
  $region2: #{policy_net_forward.1} parent=0 // pred_check
    _
  $region3: #{policy_net_forward.1} parent=0 // pred_check_branch
    %12 = sbr.rel (0) target = $region5
  $region4: #{policy_net_forward.1} parent=0 // pred_region
    _
  $region5: #{policy_net_forward.1} parent=0 // pred_fallthru
    _
  // Predicated region
  $region6: #{policy_net_forward.1} parent=0 // pred_check
    _
  $region7: #{policy_net_forward.1} parent=0 // pred_check_branch
    %14 = sbr.rel (0) target = $region9
  $region8: #{policy_net_forward.1} parent=0 // pred_region
    _
  $region9: #{policy_net_forward.1} parent=0 // pred_fallthru
    _
  // Predicated region
  $region10: #{policy_net_forward.1} parent=0 // pred_check
    _
  $region11: #{policy_net_forward.1} parent=0 // pred_check_branch
    %16 = sbr.rel (0) target = $region13
  $region12: #{policy_net_forward.1} parent=0 // pred_region
    _
  $region13: #{policy_net_forward.1} parent=0 // pred_fallthru
    _
  // Predicated region
  $region14: #{policy_net_forward.1} parent=0 // pred_check
    _
  $region15: #{policy_net_forward.1} parent=0 // pred_check_branch
    %18 = sbr.rel (0) target = $region17
  $region16: #{policy_net_forward.1} parent=0 // pred_region
    _
  $region17: #{policy_net_forward.1} parent=0 // pred_fallthru
    _
  // Predicated region
  $region18: #{policy_net_forward.1} parent=0 // pred_check
    _
  $region19: #{policy_net_forward.1} parent=0 // pred_check_branch
    %20 = sbr.rel (0) target = $region21
  $region20: #{policy_net_forward.1} parent=0 // pred_region
    _
  $region21: #{policy_net_forward.1} parent=0 // pred_fallthru
    _
  %v21 = vld [vmem:[%s0] sm:$0x7]
  %v22 = vld [vmem:[%s1] sm:$0xff]
  %v23 = vld [vmem:[%s1 + $0x8] sm:$0xff]
  %v24 = vld [vmem:[%s1 + $0x10] sm:$0xff]
  %v25 = vld [vmem:[%s1 + $0x18] sm:$0xff]
  %v26 = vld [vmem:[%s1 + $0x20] sm:$0xff]
  %v27 = vld [vmem:[%s1 + $0x28] sm:$0xff]
  %v28 = vld [vmem:[%s1 + $0x30] sm:$0xff]
  %v29 = vld [vmem:[%s1 + $0x38] sm:$0xff]
  %v30 = vld [vmem:[%s1 + $0x40] sm:$0xff]
  %v31 = vld [vmem:[%s1 + $0x48] sm:$0xff]
  %v32 = vld [vmem:[%s1 + $0x50] sm:$0xff]
  %v33 = vld [vmem:[%s1 + $0x58] sm:$0xff]
  %v34 = vld [vmem:[%s1 + $0x60] sm:$0xff]
  %v35 = vld [vmem:[%s1 + $0x68] sm:$0xff]
  %v36 = vld [vmem:[%s1 + $0x70] sm:$0xff]
  %v37 = vld [vmem:[%s1 + $0x78] sm:$0xff]
  %v38 = vld [vmem:[%s1 + $0x80] sm:$0xff]
  %v39 = vld [vmem:[%s1 + $0x88] sm:$0xff]
  %v40 = vld [vmem:[%s1 + $0x90] sm:$0xff]
  %v41 = vld [vmem:[%s1 + $0x98] sm:$0xff]
  %v42 = vld [vmem:[%s1 + $0xa0] sm:$0xff]
  %v43 = vld [vmem:[%s1 + $0xa8] sm:$0xff]
  %v44 = vld [vmem:[%s1 + $0xb0] sm:$0xff]
  %v45 = vld [vmem:[%s1 + $0xb8] sm:$0xff]
  %v46 = vld [vmem:[%s1 + $0xc0] sm:$0xff]
  %v47 = vld [vmem:[%s1 + $0xc8] sm:$0xff]
  %v48 = vld [vmem:[%s1 + $0xd0] sm:$0xff]
  %v49 = vld [vmem:[%s1 + $0xd8] sm:$0xff]
  %v50 = vld [vmem:[%s1 + $0xe0] sm:$0xff]
  %v51 = vld [vmem:[%s1 + $0xe8] sm:$0xff]
  %v52 = vld [vmem:[%s1 + $0xf0] sm:$0xff]
  %v53 = vld [vmem:[%s1 + $0xf8] sm:$0xff]
  %v54 = vld [vmem:[%s2] sm:$0xff]
  %v55 = vld [vmem:[%s2 + $0x8] sm:$0xff]
  %v56 = vld [vmem:[%s2 + $0x10] sm:$0xff]
  %v57 = vld [vmem:[%s2 + $0x18] sm:$0xff]
  %v58 = vld [vmem:[%s2 + $0x20] sm:$0xff]
  %v59 = vld [vmem:[%s2 + $0x28] sm:$0xff]
  %v60 = vld [vmem:[%s2 + $0x30] sm:$0xff]
  %v61 = vld [vmem:[%s2 + $0x38] sm:$0xff]
  %v62 = vld [vmem:[%s2 + $0x40] sm:$0xff]
  %v63 = vld [vmem:[%s2 + $0x48] sm:$0xff]
  %v64 = vld [vmem:[%s2 + $0x50] sm:$0xff]
  %v65 = vld [vmem:[%s2 + $0x58] sm:$0xff]
  %v66 = vld [vmem:[%s2 + $0x60] sm:$0xff]
  %v67 = vld [vmem:[%s2 + $0x68] sm:$0xff]
  %v68 = vld [vmem:[%s2 + $0x70] sm:$0xff]
  %v69 = vld [vmem:[%s2 + $0x78] sm:$0xff]
  %v70 = vld [vmem:[%s2 + $0x80] sm:$0xff]
  %v71 = vld [vmem:[%s2 + $0x88] sm:$0xff]
  %v72 = vld [vmem:[%s2 + $0x90] sm:$0xff]
  %v73 = vld [vmem:[%s2 + $0x98] sm:$0xff]
  %v74 = vld [vmem:[%s2 + $0xa0] sm:$0xff]
  %v75 = vld [vmem:[%s2 + $0xa8] sm:$0xff]
  %v76 = vld [vmem:[%s2 + $0xb0] sm:$0xff]
  %v77 = vld [vmem:[%s2 + $0xb8] sm:$0xff]
  %v78 = vld [vmem:[%s2 + $0xc0] sm:$0xff]
  %v79 = vld [vmem:[%s2 + $0xc8] sm:$0xff]
  %v80 = vld [vmem:[%s2 + $0xd0] sm:$0xff]
  %v81 = vld [vmem:[%s2 + $0xd8] sm:$0xff]
  %v82 = vld [vmem:[%s2 + $0xe0] sm:$0xff]
  %v83 = vld [vmem:[%s2 + $0xe8] sm:$0xff]
  %v84 = vld [vmem:[%s2 + $0xf0] sm:$0xff]
  %v85 = vld [vmem:[%s2 + $0xf8] sm:$0xff]
  %87 = vset.pattern.permute.xlu0 0
  %88 = vperm.xlu0 %87, %v22
  %v89 = vpop.permute.xlu0 %88
  %92 = vset.pattern.permute.xlu0 0
  %93 = vperm.xlu0 %92, %v23
  %v94 = vpop.permute.xlu0 %93
  %97 = vset.pattern.permute.xlu0 0
  %98 = vperm.xlu0 %97, %v24
  %v99 = vpop.permute.xlu0 %98
  %102 = vset.pattern.permute.xlu0 0
  %103 = vperm.xlu0 %102, %v25
  %v104 = vpop.permute.xlu0 %103
  %107 = vset.pattern.permute.xlu0 0
  %108 = vperm.xlu0 %107, %v26
  %v109 = vpop.permute.xlu0 %108
  %112 = vset.pattern.permute.xlu0 0
  %113 = vperm.xlu0 %112, %v27
  %v114 = vpop.permute.xlu0 %113
  %117 = vset.pattern.permute.xlu0 0
  %118 = vperm.xlu0 %117, %v28
  %v119 = vpop.permute.xlu0 %118
  %122 = vset.pattern.permute.xlu0 0
  %123 = vperm.xlu0 %122, %v29
  %v124 = vpop.permute.xlu0 %123
  %127 = vset.pattern.permute.xlu0 0
  %128 = vperm.xlu0 %127, %v30
  %v129 = vpop.permute.xlu0 %128
  %132 = vset.pattern.permute.xlu0 0
  %133 = vperm.xlu0 %132, %v31
  %v134 = vpop.permute.xlu0 %133
  %137 = vset.pattern.permute.xlu0 0
  %138 = vperm.xlu0 %137, %v32
  %v139 = vpop.permute.xlu0 %138
  %142 = vset.pattern.permute.xlu0 0
  %143 = vperm.xlu0 %142, %v33
  %v144 = vpop.permute.xlu0 %143
  %147 = vset.pattern.permute.xlu0 0
  %148 = vperm.xlu0 %147, %v34
  %v149 = vpop.permute.xlu0 %148
  %152 = vset.pattern.permute.xlu0 0
  %153 = vperm.xlu0 %152, %v35
  %v154 = vpop.permute.xlu0 %153
  %157 = vset.pattern.permute.xlu0 0
  %158 = vperm.xlu0 %157, %v36
  %v159 = vpop.permute.xlu0 %158
  %162 = vset.pattern.permute.xlu0 0
  %163 = vperm.xlu0 %162, %v37
  %v164 = vpop.permute.xlu0 %163
  %167 = vset.pattern.permute.xlu0 0
  %168 = vperm.xlu0 %167, %v38
  %v169 = vpop.permute.xlu0 %168
  %172 = vset.pattern.permute.xlu0 0
  %173 = vperm.xlu0 %172, %v39
  %v174 = vpop.permute.xlu0 %173
  %177 = vset.pattern.permute.xlu0 0
  %178 = vperm.xlu0 %177, %v40
  %v179 = vpop.permute.xlu0 %178
  %182 = vset.pattern.permute.xlu0 0
  %183 = vperm.xlu0 %182, %v41
  %v184 = vpop.permute.xlu0 %183
  %187 = vset.pattern.permute.xlu0 0
  %188 = vperm.xlu0 %187, %v42
  %v189 = vpop.permute.xlu0 %188
  %192 = vset.pattern.permute.xlu0 0
  %193 = vperm.xlu0 %192, %v43
  %v194 = vpop.permute.xlu0 %193
  %197 = vset.pattern.permute.xlu0 0
  %198 = vperm.xlu0 %197, %v44
  %v199 = vpop.permute.xlu0 %198
  %202 = vset.pattern.permute.xlu0 0
  %203 = vperm.xlu0 %202, %v45
  %v204 = vpop.permute.xlu0 %203
  %207 = vset.pattern.permute.xlu0 0
  %208 = vperm.xlu0 %207, %v46
  %v209 = vpop.permute.xlu0 %208
  %212 = vset.pattern.permute.xlu0 0
  %213 = vperm.xlu0 %212, %v47
  %v214 = vpop.permute.xlu0 %213
  %217 = vset.pattern.permute.xlu0 0
  %218 = vperm.xlu0 %217, %v48
  %v219 = vpop.permute.xlu0 %218
  %222 = vset.pattern.permute.xlu0 0
  %223 = vperm.xlu0 %222, %v49
  %v224 = vpop.permute.xlu0 %223
  %227 = vset.pattern.permute.xlu0 0
  %228 = vperm.xlu0 %227, %v50
  %v229 = vpop.permute.xlu0 %228
  %232 = vset.pattern.permute.xlu0 0
  %233 = vperm.xlu0 %232, %v51
  %v234 = vpop.permute.xlu0 %233
  %237 = vset.pattern.permute.xlu0 0
  %238 = vperm.xlu0 %237, %v52
  %v239 = vpop.permute.xlu0 %238
  %242 = vset.pattern.permute.xlu0 0
  %243 = vperm.xlu0 %242, %v53
  %v244 = vpop.permute.xlu0 %243
  %v246 = vlaneseq
  %v247 = vshrl.u32 %v246, 7
  %v248 = vsub.s32 0, %v247
  %v249 = vrot.slane %v21, %v248
  %v250 = vmul.f32 %v89, %v249
  %v251 = vmul.f32 %v94, %v249
  %v252 = vmul.f32 %v99, %v249
  %v253 = vmul.f32 %v104, %v249
  %v254 = vmul.f32 %v109, %v249
  %v255 = vmul.f32 %v114, %v249
  %v256 = vmul.f32 %v119, %v249
  %v257 = vmul.f32 %v124, %v249
  %v258 = vmul.f32 %v129, %v249
  %v259 = vmul.f32 %v134, %v249
  %v260 = vmul.f32 %v139, %v249
  %v261 = vmul.f32 %v144, %v249
  %v262 = vmul.f32 %v149, %v249
  %v263 = vmul.f32 %v154, %v249
  %v264 = vmul.f32 %v159, %v249
  %v265 = vmul.f32 %v164, %v249
  %v266 = vmul.f32 %v169, %v249
  %v267 = vmul.f32 %v174, %v249
  %v268 = vmul.f32 %v179, %v249
  %v269 = vmul.f32 %v184, %v249
  %v270 = vmul.f32 %v189, %v249
  %v271 = vmul.f32 %v194, %v249
  %v272 = vmul.f32 %v199, %v249
  %v273 = vmul.f32 %v204, %v249
  %v274 = vmul.f32 %v209, %v249
  %v275 = vmul.f32 %v214, %v249
  %v276 = vmul.f32 %v219, %v249
  %v277 = vmul.f32 %v224, %v249
  %v278 = vmul.f32 %v229, %v249
  %v279 = vmul.f32 %v234, %v249
  %v280 = vmul.f32 %v239, %v249
  %v281 = vmul.f32 %v244, %v249
  %283 = vset.pattern.permute.xlu0 0
  %284 = vperm.xlu0 %283, %v54
  %v285 = vpop.permute.xlu0 %284
  %288 = vset.pattern.permute.xlu0 0
  %289 = vperm.xlu0 %288, %v55
  %v290 = vpop.permute.xlu0 %289
  %293 = vset.pattern.permute.xlu0 0
  %294 = vperm.xlu0 %293, %v56
  %v295 = vpop.permute.xlu0 %294
  %298 = vset.pattern.permute.xlu0 0
  %299 = vperm.xlu0 %298, %v57
  %v300 = vpop.permute.xlu0 %299
  %303 = vset.pattern.permute.xlu0 0
  %304 = vperm.xlu0 %303, %v58
  %v305 = vpop.permute.xlu0 %304
  %308 = vset.pattern.permute.xlu0 0
  %309 = vperm.xlu0 %308, %v59
  %v310 = vpop.permute.xlu0 %309
  %313 = vset.pattern.permute.xlu0 0
  %314 = vperm.xlu0 %313, %v60
  %v315 = vpop.permute.xlu0 %314
  %318 = vset.pattern.permute.xlu0 0
  %319 = vperm.xlu0 %318, %v61
  %v320 = vpop.permute.xlu0 %319
  %323 = vset.pattern.permute.xlu0 0
  %324 = vperm.xlu0 %323, %v62
  %v325 = vpop.permute.xlu0 %324
  %328 = vset.pattern.permute.xlu0 0
  %329 = vperm.xlu0 %328, %v63
  %v330 = vpop.permute.xlu0 %329
  %333 = vset.pattern.permute.xlu0 0
  %334 = vperm.xlu0 %333, %v64
  %v335 = vpop.permute.xlu0 %334
  %338 = vset.pattern.permute.xlu0 0
  %339 = vperm.xlu0 %338, %v65
  %v340 = vpop.permute.xlu0 %339
  %343 = vset.pattern.permute.xlu0 0
  %344 = vperm.xlu0 %343, %v66
  %v345 = vpop.permute.xlu0 %344
  %348 = vset.pattern.permute.xlu0 0
  %349 = vperm.xlu0 %348, %v67
  %v350 = vpop.permute.xlu0 %349
  %353 = vset.pattern.permute.xlu0 0
  %354 = vperm.xlu0 %353, %v68
  %v355 = vpop.permute.xlu0 %354
  %358 = vset.pattern.permute.xlu0 0
  %359 = vperm.xlu0 %358, %v69
  %v360 = vpop.permute.xlu0 %359
  %363 = vset.pattern.permute.xlu0 0
  %364 = vperm.xlu0 %363, %v70
  %v365 = vpop.permute.xlu0 %364
  %368 = vset.pattern.permute.xlu0 0
  %369 = vperm.xlu0 %368, %v71
  %v370 = vpop.permute.xlu0 %369
  %373 = vset.pattern.permute.xlu0 0
  %374 = vperm.xlu0 %373, %v72
  %v375 = vpop.permute.xlu0 %374
  %378 = vset.pattern.permute.xlu0 0
  %379 = vperm.xlu0 %378, %v73
  %v380 = vpop.permute.xlu0 %379
  %383 = vset.pattern.permute.xlu0 0
  %384 = vperm.xlu0 %383, %v74
  %v385 = vpop.permute.xlu0 %384
  %388 = vset.pattern.permute.xlu0 0
  %389 = vperm.xlu0 %388, %v75
  %v390 = vpop.permute.xlu0 %389
  %393 = vset.pattern.permute.xlu0 0
  %394 = vperm.xlu0 %393, %v76
  %v395 = vpop.permute.xlu0 %394
  %398 = vset.pattern.permute.xlu0 0
  %399 = vperm.xlu0 %398, %v77
  %v400 = vpop.permute.xlu0 %399
  %403 = vset.pattern.permute.xlu0 0
  %404 = vperm.xlu0 %403, %v78
  %v405 = vpop.permute.xlu0 %404
  %408 = vset.pattern.permute.xlu0 0
  %409 = vperm.xlu0 %408, %v79
  %v410 = vpop.permute.xlu0 %409
  %413 = vset.pattern.permute.xlu0 0
  %414 = vperm.xlu0 %413, %v80
  %v415 = vpop.permute.xlu0 %414
  %418 = vset.pattern.permute.xlu0 0
  %419 = vperm.xlu0 %418, %v81
  %v420 = vpop.permute.xlu0 %419
  %423 = vset.pattern.permute.xlu0 0
  %424 = vperm.xlu0 %423, %v82
  %v425 = vpop.permute.xlu0 %424
  %428 = vset.pattern.permute.xlu0 0
  %429 = vperm.xlu0 %428, %v83
  %v430 = vpop.permute.xlu0 %429
  %433 = vset.pattern.permute.xlu0 0
  %434 = vperm.xlu0 %433, %v84
  %v435 = vpop.permute.xlu0 %434
  %438 = vset.pattern.permute.xlu0 0
  %439 = vperm.xlu0 %438, %v85
  %v440 = vpop.permute.xlu0 %439
  %v442 = vadd.f32 %v285, %v250
  %v443 = vadd.f32 %v290, %v251
  %v444 = vadd.f32 %v295, %v252
  %v445 = vadd.f32 %v300, %v253
  %v446 = vadd.f32 %v305, %v254
  %v447 = vadd.f32 %v310, %v255
  %v448 = vadd.f32 %v315, %v256
  %v449 = vadd.f32 %v320, %v257
  %v450 = vadd.f32 %v325, %v258
  %v451 = vadd.f32 %v330, %v259
  %v452 = vadd.f32 %v335, %v260
  %v453 = vadd.f32 %v340, %v261
  %v454 = vadd.f32 %v345, %v262
  %v455 = vadd.f32 %v350, %v263
  %v456 = vadd.f32 %v355, %v264
  %v457 = vadd.f32 %v360, %v265
  %v458 = vadd.f32 %v365, %v266
  %v459 = vadd.f32 %v370, %v267
  %v460 = vadd.f32 %v375, %v268
  %v461 = vadd.f32 %v380, %v269
  %v462 = vadd.f32 %v385, %v270
  %v463 = vadd.f32 %v390, %v271
  %v464 = vadd.f32 %v395, %v272
  %v465 = vadd.f32 %v400, %v273
  %v466 = vadd.f32 %v405, %v274
  %v467 = vadd.f32 %v410, %v275
  %v468 = vadd.f32 %v415, %v276
  %v469 = vadd.f32 %v420, %v277
  %v470 = vadd.f32 %v425, %v278
  %v471 = vadd.f32 %v430, %v279
  %v472 = vadd.f32 %v435, %v280
  %v473 = vadd.f32 %v440, %v281
  %474 = vset.pattern.permute.xlu0 1
  %475 = vperm.xlu0 %474, %v22
  %v476 = vpop.permute.xlu0 %475
  %478 = vset.pattern.permute.xlu0 1
  %479 = vperm.xlu0 %478, %v23
  %v480 = vpop.permute.xlu0 %479
  %482 = vset.pattern.permute.xlu0 1
  %483 = vperm.xlu0 %482, %v24
  %v484 = vpop.permute.xlu0 %483
  %486 = vset.pattern.permute.xlu0 1
  %487 = vperm.xlu0 %486, %v25
  %v488 = vpop.permute.xlu0 %487
  %490 = vset.pattern.permute.xlu0 1
  %491 = vperm.xlu0 %490, %v26
  %v492 = vpop.permute.xlu0 %491
  %494 = vset.pattern.permute.xlu0 1
  %495 = vperm.xlu0 %494, %v27
  %v496 = vpop.permute.xlu0 %495
  %498 = vset.pattern.permute.xlu0 1
  %499 = vperm.xlu0 %498, %v28
  %v500 = vpop.permute.xlu0 %499
  %502 = vset.pattern.permute.xlu0 1
  %503 = vperm.xlu0 %502, %v29
  %v504 = vpop.permute.xlu0 %503
  %506 = vset.pattern.permute.xlu0 1
  %507 = vperm.xlu0 %506, %v30
  %v508 = vpop.permute.xlu0 %507
  %510 = vset.pattern.permute.xlu0 1
  %511 = vperm.xlu0 %510, %v31
  %v512 = vpop.permute.xlu0 %511
  %514 = vset.pattern.permute.xlu0 1
  %515 = vperm.xlu0 %514, %v32
  %v516 = vpop.permute.xlu0 %515
  %518 = vset.pattern.permute.xlu0 1
  %519 = vperm.xlu0 %518, %v33
  %v520 = vpop.permute.xlu0 %519
  %522 = vset.pattern.permute.xlu0 1
  %523 = vperm.xlu0 %522, %v34
  %v524 = vpop.permute.xlu0 %523
  %526 = vset.pattern.permute.xlu0 1
  %527 = vperm.xlu0 %526, %v35
  %v528 = vpop.permute.xlu0 %527
  %530 = vset.pattern.permute.xlu0 1
  %531 = vperm.xlu0 %530, %v36
  %v532 = vpop.permute.xlu0 %531
  %534 = vset.pattern.permute.xlu0 1
  %535 = vperm.xlu0 %534, %v37
  %v536 = vpop.permute.xlu0 %535
  %538 = vset.pattern.permute.xlu0 1
  %539 = vperm.xlu0 %538, %v38
  %v540 = vpop.permute.xlu0 %539
  %542 = vset.pattern.permute.xlu0 1
  %543 = vperm.xlu0 %542, %v39
  %v544 = vpop.permute.xlu0 %543
  %546 = vset.pattern.permute.xlu0 1
  %547 = vperm.xlu0 %546, %v40
  %v548 = vpop.permute.xlu0 %547
  %550 = vset.pattern.permute.xlu0 1
  %551 = vperm.xlu0 %550, %v41
  %v552 = vpop.permute.xlu0 %551
  %554 = vset.pattern.permute.xlu0 1
  %555 = vperm.xlu0 %554, %v42
  %v556 = vpop.permute.xlu0 %555
  %558 = vset.pattern.permute.xlu0 1
  %559 = vperm.xlu0 %558, %v43
  %v560 = vpop.permute.xlu0 %559
  %562 = vset.pattern.permute.xlu0 1
  %563 = vperm.xlu0 %562, %v44
  %v564 = vpop.permute.xlu0 %563
  %566 = vset.pattern.permute.xlu0 1
  %567 = vperm.xlu0 %566, %v45
  %v568 = vpop.permute.xlu0 %567
  %570 = vset.pattern.permute.xlu0 1
  %571 = vperm.xlu0 %570, %v46
  %v572 = vpop.permute.xlu0 %571
  %574 = vset.pattern.permute.xlu0 1
  %575 = vperm.xlu0 %574, %v47
  %v576 = vpop.permute.xlu0 %575
  %578 = vset.pattern.permute.xlu0 1
  %579 = vperm.xlu0 %578, %v48
  %v580 = vpop.permute.xlu0 %579
  %582 = vset.pattern.permute.xlu0 1
  %583 = vperm.xlu0 %582, %v49
  %v584 = vpop.permute.xlu0 %583
  %586 = vset.pattern.permute.xlu0 1
  %587 = vperm.xlu0 %586, %v50
  %v588 = vpop.permute.xlu0 %587
  %590 = vset.pattern.permute.xlu0 1
  %591 = vperm.xlu0 %590, %v51
  %v592 = vpop.permute.xlu0 %591
  %594 = vset.pattern.permute.xlu0 1
  %595 = vperm.xlu0 %594, %v52
  %v596 = vpop.permute.xlu0 %595
  %598 = vset.pattern.permute.xlu0 1
  %599 = vperm.xlu0 %598, %v53
  %v600 = vpop.permute.xlu0 %599
  %v602 = vlaneseq
  %v603 = vshrl.u32 %v602, 7
  %v604 = vsub.s32 1, %v603
  %v605 = vrot.slane %v21, %v604
  %v606 = vmul.f32 %v476, %v605
  %v607 = vmul.f32 %v480, %v605
  %v608 = vmul.f32 %v484, %v605
  %v609 = vmul.f32 %v488, %v605
  %v610 = vmul.f32 %v492, %v605
  %v611 = vmul.f32 %v496, %v605
  %v612 = vmul.f32 %v500, %v605
  %v613 = vmul.f32 %v504, %v605
  %v614 = vmul.f32 %v508, %v605
  %v615 = vmul.f32 %v512, %v605
  %v616 = vmul.f32 %v516, %v605
  %v617 = vmul.f32 %v520, %v605
  %v618 = vmul.f32 %v524, %v605
  %v619 = vmul.f32 %v528, %v605
  %v620 = vmul.f32 %v532, %v605
  %v621 = vmul.f32 %v536, %v605
  %v622 = vmul.f32 %v540, %v605
  %v623 = vmul.f32 %v544, %v605
  %v624 = vmul.f32 %v548, %v605
  %v625 = vmul.f32 %v552, %v605
  %v626 = vmul.f32 %v556, %v605
  %v627 = vmul.f32 %v560, %v605
  %v628 = vmul.f32 %v564, %v605
  %v629 = vmul.f32 %v568, %v605
  %v630 = vmul.f32 %v572, %v605
  %v631 = vmul.f32 %v576, %v605
  %v632 = vmul.f32 %v580, %v605
  %v633 = vmul.f32 %v584, %v605
  %v634 = vmul.f32 %v588, %v605
  %v635 = vmul.f32 %v592, %v605
  %v636 = vmul.f32 %v596, %v605
  %v637 = vmul.f32 %v600, %v605
  %v638 = vadd.f32 %v442, %v606
  %v639 = vadd.f32 %v443, %v607
  %v640 = vadd.f32 %v444, %v608
  %v641 = vadd.f32 %v445, %v609
  %v642 = vadd.f32 %v446, %v610
  %v643 = vadd.f32 %v447, %v611
  %v644 = vadd.f32 %v448, %v612
  %v645 = vadd.f32 %v449, %v613
  %v646 = vadd.f32 %v450, %v614
  %v647 = vadd.f32 %v451, %v615
  %v648 = vadd.f32 %v452, %v616
  %v649 = vadd.f32 %v453, %v617
  %v650 = vadd.f32 %v454, %v618
  %v651 = vadd.f32 %v455, %v619
  %v652 = vadd.f32 %v456, %v620
  %v653 = vadd.f32 %v457, %v621
  %v654 = vadd.f32 %v458, %v622
  %v655 = vadd.f32 %v459, %v623
  %v656 = vadd.f32 %v460, %v624
  %v657 = vadd.f32 %v461, %v625
  %v658 = vadd.f32 %v462, %v626
  %v659 = vadd.f32 %v463, %v627
  %v660 = vadd.f32 %v464, %v628
  %v661 = vadd.f32 %v465, %v629
  %v662 = vadd.f32 %v466, %v630
  %v663 = vadd.f32 %v467, %v631
  %v664 = vadd.f32 %v468, %v632
  %v665 = vadd.f32 %v469, %v633
  %v666 = vadd.f32 %v470, %v634
  %v667 = vadd.f32 %v471, %v635
  %v668 = vadd.f32 %v472, %v636
  %v669 = vadd.f32 %v473, %v637
  %670 = vset.pattern.permute.xlu0 2
  %671 = vperm.xlu0 %670, %v22
  %v672 = vpop.permute.xlu0 %671
  %674 = vset.pattern.permute.xlu0 2
  %675 = vperm.xlu0 %674, %v23
  %v676 = vpop.permute.xlu0 %675
  %678 = vset.pattern.permute.xlu0 2
  %679 = vperm.xlu0 %678, %v24
  %v680 = vpop.permute.xlu0 %679
  %682 = vset.pattern.permute.xlu0 2
  %683 = vperm.xlu0 %682, %v25
  %v684 = vpop.permute.xlu0 %683
  %686 = vset.pattern.permute.xlu0 2
  %687 = vperm.xlu0 %686, %v26
  %v688 = vpop.permute.xlu0 %687
  %690 = vset.pattern.permute.xlu0 2
  %691 = vperm.xlu0 %690, %v27
  %v692 = vpop.permute.xlu0 %691
  %694 = vset.pattern.permute.xlu0 2
  %695 = vperm.xlu0 %694, %v28
  %v696 = vpop.permute.xlu0 %695
  %698 = vset.pattern.permute.xlu0 2
  %699 = vperm.xlu0 %698, %v29
  %v700 = vpop.permute.xlu0 %699
  %702 = vset.pattern.permute.xlu0 2
  %703 = vperm.xlu0 %702, %v30
  %v704 = vpop.permute.xlu0 %703
  %706 = vset.pattern.permute.xlu0 2
  %707 = vperm.xlu0 %706, %v31
  %v708 = vpop.permute.xlu0 %707
  %710 = vset.pattern.permute.xlu0 2
  %711 = vperm.xlu0 %710, %v32
  %v712 = vpop.permute.xlu0 %711
  %714 = vset.pattern.permute.xlu0 2
  %715 = vperm.xlu0 %714, %v33
  %v716 = vpop.permute.xlu0 %715
  %718 = vset.pattern.permute.xlu0 2
  %719 = vperm.xlu0 %718, %v34
  %v720 = vpop.permute.xlu0 %719
  %722 = vset.pattern.permute.xlu0 2
  %723 = vperm.xlu0 %722, %v35
  %v724 = vpop.permute.xlu0 %723
  %726 = vset.pattern.permute.xlu0 2
  %727 = vperm.xlu0 %726, %v36
  %v728 = vpop.permute.xlu0 %727
  %730 = vset.pattern.permute.xlu0 2
  %731 = vperm.xlu0 %730, %v37
  %v732 = vpop.permute.xlu0 %731
  %734 = vset.pattern.permute.xlu0 2
  %735 = vperm.xlu0 %734, %v38
  %v736 = vpop.permute.xlu0 %735
  %738 = vset.pattern.permute.xlu0 2
  %739 = vperm.xlu0 %738, %v39
  %v740 = vpop.permute.xlu0 %739
  %742 = vset.pattern.permute.xlu0 2
  %743 = vperm.xlu0 %742, %v40
  %v744 = vpop.permute.xlu0 %743
  %746 = vset.pattern.permute.xlu0 2
  %747 = vperm.xlu0 %746, %v41
  %v748 = vpop.permute.xlu0 %747
  %750 = vset.pattern.permute.xlu0 2
  %751 = vperm.xlu0 %750, %v42
  %v752 = vpop.permute.xlu0 %751
  %754 = vset.pattern.permute.xlu0 2
  %755 = vperm.xlu0 %754, %v43
  %v756 = vpop.permute.xlu0 %755
  %758 = vset.pattern.permute.xlu0 2
  %759 = vperm.xlu0 %758, %v44
  %v760 = vpop.permute.xlu0 %759
  %762 = vset.pattern.permute.xlu0 2
  %763 = vperm.xlu0 %762, %v45
  %v764 = vpop.permute.xlu0 %763
  %766 = vset.pattern.permute.xlu0 2
  %767 = vperm.xlu0 %766, %v46
  %v768 = vpop.permute.xlu0 %767
  %770 = vset.pattern.permute.xlu0 2
  %771 = vperm.xlu0 %770, %v47
  %v772 = vpop.permute.xlu0 %771
  %774 = vset.pattern.permute.xlu0 2
  %775 = vperm.xlu0 %774, %v48
  %v776 = vpop.permute.xlu0 %775
  %778 = vset.pattern.permute.xlu0 2
  %779 = vperm.xlu0 %778, %v49
  %v780 = vpop.permute.xlu0 %779
  %782 = vset.pattern.permute.xlu0 2
  %783 = vperm.xlu0 %782, %v50
  %v784 = vpop.permute.xlu0 %783
  %786 = vset.pattern.permute.xlu0 2
  %787 = vperm.xlu0 %786, %v51
  %v788 = vpop.permute.xlu0 %787
  %790 = vset.pattern.permute.xlu0 2
  %791 = vperm.xlu0 %790, %v52
  %v792 = vpop.permute.xlu0 %791
  %794 = vset.pattern.permute.xlu0 2
  %795 = vperm.xlu0 %794, %v53
  %v796 = vpop.permute.xlu0 %795
  %v798 = vlaneseq
  %v799 = vshrl.u32 %v798, 7
  %v800 = vsub.s32 2, %v799
  %v801 = vrot.slane %v21, %v800
  %v802 = vmul.f32 %v672, %v801
  %v803 = vmul.f32 %v676, %v801
  %v804 = vmul.f32 %v680, %v801
  %v805 = vmul.f32 %v684, %v801
  %v806 = vmul.f32 %v688, %v801
  %v807 = vmul.f32 %v692, %v801
  %v808 = vmul.f32 %v696, %v801
  %v809 = vmul.f32 %v700, %v801
  %v810 = vmul.f32 %v704, %v801
  %v811 = vmul.f32 %v708, %v801
  %v812 = vmul.f32 %v712, %v801
  %v813 = vmul.f32 %v716, %v801
  %v814 = vmul.f32 %v720, %v801
  %v815 = vmul.f32 %v724, %v801
  %v816 = vmul.f32 %v728, %v801
  %v817 = vmul.f32 %v732, %v801
  %v818 = vmul.f32 %v736, %v801
  %v819 = vmul.f32 %v740, %v801
  %v820 = vmul.f32 %v744, %v801
  %v821 = vmul.f32 %v748, %v801
  %v822 = vmul.f32 %v752, %v801
  %v823 = vmul.f32 %v756, %v801
  %v824 = vmul.f32 %v760, %v801
  %v825 = vmul.f32 %v764, %v801
  %v826 = vmul.f32 %v768, %v801
  %v827 = vmul.f32 %v772, %v801
  %v828 = vmul.f32 %v776, %v801
  %v829 = vmul.f32 %v780, %v801
  %v830 = vmul.f32 %v784, %v801
  %v831 = vmul.f32 %v788, %v801
  %v832 = vmul.f32 %v792, %v801
  %v833 = vmul.f32 %v796, %v801
  %v834 = vadd.f32 %v638, %v802
  %v835 = vadd.f32 %v639, %v803
  %v836 = vadd.f32 %v640, %v804
  %v837 = vadd.f32 %v641, %v805
  %v838 = vadd.f32 %v642, %v806
  %v839 = vadd.f32 %v643, %v807
  %v840 = vadd.f32 %v644, %v808
  %v841 = vadd.f32 %v645, %v809
  %v842 = vadd.f32 %v646, %v810
  %v843 = vadd.f32 %v647, %v811
  %v844 = vadd.f32 %v648, %v812
  %v845 = vadd.f32 %v649, %v813
  %v846 = vadd.f32 %v650, %v814
  %v847 = vadd.f32 %v651, %v815
  %v848 = vadd.f32 %v652, %v816
  %v849 = vadd.f32 %v653, %v817
  %v850 = vadd.f32 %v654, %v818
  %v851 = vadd.f32 %v655, %v819
  %v852 = vadd.f32 %v656, %v820
  %v853 = vadd.f32 %v657, %v821
  %v854 = vadd.f32 %v658, %v822
  %v855 = vadd.f32 %v659, %v823
  %v856 = vadd.f32 %v660, %v824
  %v857 = vadd.f32 %v661, %v825
  %v858 = vadd.f32 %v662, %v826
  %v859 = vadd.f32 %v663, %v827
  %v860 = vadd.f32 %v664, %v828
  %v861 = vadd.f32 %v665, %v829
  %v862 = vadd.f32 %v666, %v830
  %v863 = vadd.f32 %v667, %v831
  %v864 = vadd.f32 %v668, %v832
  %v865 = vadd.f32 %v669, %v833
  %v866 = vmax.f32 %v834, 0.0
  %v867 = vmax.f32 %v835, 0.0
  %v868 = vmax.f32 %v836, 0.0
  %v869 = vmax.f32 %v837, 0.0
  %v870 = vmax.f32 %v838, 0.0
  %v871 = vmax.f32 %v839, 0.0
  %v872 = vmax.f32 %v840, 0.0
  %v873 = vmax.f32 %v841, 0.0
  %v874 = vmax.f32 %v842, 0.0
  %v875 = vmax.f32 %v843, 0.0
  %v876 = vmax.f32 %v844, 0.0
  %v877 = vmax.f32 %v845, 0.0
  %v878 = vmax.f32 %v846, 0.0
  %v879 = vmax.f32 %v847, 0.0
  %v880 = vmax.f32 %v848, 0.0
  %v881 = vmax.f32 %v849, 0.0
  %v882 = vmax.f32 %v850, 0.0
  %v883 = vmax.f32 %v851, 0.0
  %v884 = vmax.f32 %v852, 0.0
  %v885 = vmax.f32 %v853, 0.0
  %v886 = vmax.f32 %v854, 0.0
  %v887 = vmax.f32 %v855, 0.0
  %v888 = vmax.f32 %v856, 0.0
  %v889 = vmax.f32 %v857, 0.0
  %v890 = vmax.f32 %v858, 0.0
  %v891 = vmax.f32 %v859, 0.0
  %v892 = vmax.f32 %v860, 0.0
  %v893 = vmax.f32 %v861, 0.0
  %v894 = vmax.f32 %v862, 0.0
  %v895 = vmax.f32 %v863, 0.0
  %v896 = vmax.f32 %v864, 0.0
  %v897 = vmax.f32 %v865, 0.0
  %v898 = vld [vmem:[%s3] sm:$0xff]
  %v899 = vld [vmem:[%s3 + $0x8] sm:$0xff]
  %v900 = vld [vmem:[%s3 + $0x10] sm:$0xff]
  %v901 = vld [vmem:[%s3 + $0x18] sm:$0xff]
  %v902 = vld [vmem:[%s3 + $0x20] sm:$0xff]
  %v903 = vld [vmem:[%s3 + $0x28] sm:$0xff]
  %v904 = vld [vmem:[%s3 + $0x30] sm:$0xff]
  %v905 = vld [vmem:[%s3 + $0x38] sm:$0xff]
  %v906 = vld [vmem:[%s3 + $0x40] sm:$0xff]
  %v907 = vld [vmem:[%s3 + $0x48] sm:$0xff]
  %v908 = vld [vmem:[%s3 + $0x50] sm:$0xff]
  %v909 = vld [vmem:[%s3 + $0x58] sm:$0xff]
  %v910 = vld [vmem:[%s3 + $0x60] sm:$0xff]
  %v911 = vld [vmem:[%s3 + $0x68] sm:$0xff]
  %v912 = vld [vmem:[%s3 + $0x70] sm:$0xff]
  %v913 = vld [vmem:[%s3 + $0x78] sm:$0xff]
  %v914 = vld [vmem:[%s3 + $0x80] sm:$0xff]
  %v915 = vld [vmem:[%s3 + $0x88] sm:$0xff]
  %v916 = vld [vmem:[%s3 + $0x90] sm:$0xff]
  %v917 = vld [vmem:[%s3 + $0x98] sm:$0xff]
  %v918 = vld [vmem:[%s3 + $0xa0] sm:$0xff]
  %v919 = vld [vmem:[%s3 + $0xa8] sm:$0xff]
  %v920 = vld [vmem:[%s3 + $0xb0] sm:$0xff]
  %v921 = vld [vmem:[%s3 + $0xb8] sm:$0xff]
  %v922 = vld [vmem:[%s3 + $0xc0] sm:$0xff]
  %v923 = vld [vmem:[%s3 + $0xc8] sm:$0xff]
  %v924 = vld [vmem:[%s3 + $0xd0] sm:$0xff]
  %v925 = vld [vmem:[%s3 + $0xd8] sm:$0xff]
  %v926 = vld [vmem:[%s3 + $0xe0] sm:$0xff]
  %v927 = vld [vmem:[%s3 + $0xe8] sm:$0xff]
  %v928 = vld [vmem:[%s3 + $0xf0] sm:$0xff]
  %v929 = vld [vmem:[%s3 + $0xf8] sm:$0xff]
  %931 = vset.pattern.permute.xlu0 0
  %932 = vperm.xlu0 %931, %v898
  %v933 = vpop.permute.xlu0 %932
  %936 = vset.pattern.permute.xlu0 0
  %937 = vperm.xlu0 %936, %v899
  %v938 = vpop.permute.xlu0 %937
  %941 = vset.pattern.permute.xlu0 0
  %942 = vperm.xlu0 %941, %v900
  %v943 = vpop.permute.xlu0 %942
  %946 = vset.pattern.permute.xlu0 0
  %947 = vperm.xlu0 %946, %v901
  %v948 = vpop.permute.xlu0 %947
  %951 = vset.pattern.permute.xlu0 0
  %952 = vperm.xlu0 %951, %v902
  %v953 = vpop.permute.xlu0 %952
  %956 = vset.pattern.permute.xlu0 0
  %957 = vperm.xlu0 %956, %v903
  %v958 = vpop.permute.xlu0 %957
  %961 = vset.pattern.permute.xlu0 0
  %962 = vperm.xlu0 %961, %v904
  %v963 = vpop.permute.xlu0 %962
  %966 = vset.pattern.permute.xlu0 0
  %967 = vperm.xlu0 %966, %v905
  %v968 = vpop.permute.xlu0 %967
  %971 = vset.pattern.permute.xlu0 0
  %972 = vperm.xlu0 %971, %v906
  %v973 = vpop.permute.xlu0 %972
  %976 = vset.pattern.permute.xlu0 0
  %977 = vperm.xlu0 %976, %v907
  %v978 = vpop.permute.xlu0 %977
  %981 = vset.pattern.permute.xlu0 0
  %982 = vperm.xlu0 %981, %v908
  %v983 = vpop.permute.xlu0 %982
  %986 = vset.pattern.permute.xlu0 0
  %987 = vperm.xlu0 %986, %v909
  %v988 = vpop.permute.xlu0 %987
  %991 = vset.pattern.permute.xlu0 0
  %992 = vperm.xlu0 %991, %v910
  %v993 = vpop.permute.xlu0 %992
  %996 = vset.pattern.permute.xlu0 0
  %997 = vperm.xlu0 %996, %v911
  %v998 = vpop.permute.xlu0 %997
  %1001 = vset.pattern.permute.xlu0 0
  %1002 = vperm.xlu0 %1001, %v912
  %v1003 = vpop.permute.xlu0 %1002
  %1006 = vset.pattern.permute.xlu0 0
  %1007 = vperm.xlu0 %1006, %v913
  %v1008 = vpop.permute.xlu0 %1007
  %1011 = vset.pattern.permute.xlu0 0
  %1012 = vperm.xlu0 %1011, %v914
  %v1013 = vpop.permute.xlu0 %1012
  %1016 = vset.pattern.permute.xlu0 0
  %1017 = vperm.xlu0 %1016, %v915
  %v1018 = vpop.permute.xlu0 %1017
  %1021 = vset.pattern.permute.xlu0 0
  %1022 = vperm.xlu0 %1021, %v916
  %v1023 = vpop.permute.xlu0 %1022
  %1026 = vset.pattern.permute.xlu0 0
  %1027 = vperm.xlu0 %1026, %v917
  %v1028 = vpop.permute.xlu0 %1027
  %1031 = vset.pattern.permute.xlu0 0
  %1032 = vperm.xlu0 %1031, %v918
  %v1033 = vpop.permute.xlu0 %1032
  %1036 = vset.pattern.permute.xlu0 0
  %1037 = vperm.xlu0 %1036, %v919
  %v1038 = vpop.permute.xlu0 %1037
  %1041 = vset.pattern.permute.xlu0 0
  %1042 = vperm.xlu0 %1041, %v920
  %v1043 = vpop.permute.xlu0 %1042
  %1046 = vset.pattern.permute.xlu0 0
  %1047 = vperm.xlu0 %1046, %v921
  %v1048 = vpop.permute.xlu0 %1047
  %1051 = vset.pattern.permute.xlu0 0
  %1052 = vperm.xlu0 %1051, %v922
  %v1053 = vpop.permute.xlu0 %1052
  %1056 = vset.pattern.permute.xlu0 0
  %1057 = vperm.xlu0 %1056, %v923
  %v1058 = vpop.permute.xlu0 %1057
  %1061 = vset.pattern.permute.xlu0 0
  %1062 = vperm.xlu0 %1061, %v924
  %v1063 = vpop.permute.xlu0 %1062
  %1066 = vset.pattern.permute.xlu0 0
  %1067 = vperm.xlu0 %1066, %v925
  %v1068 = vpop.permute.xlu0 %1067
  %1071 = vset.pattern.permute.xlu0 0
  %1072 = vperm.xlu0 %1071, %v926
  %v1073 = vpop.permute.xlu0 %1072
  %1076 = vset.pattern.permute.xlu0 0
  %1077 = vperm.xlu0 %1076, %v927
  %v1078 = vpop.permute.xlu0 %1077
  %1081 = vset.pattern.permute.xlu0 0
  %1082 = vperm.xlu0 %1081, %v928
  %v1083 = vpop.permute.xlu0 %1082
  %1086 = vset.pattern.permute.xlu0 0
  %1087 = vperm.xlu0 %1086, %v929
  %v1088 = vpop.permute.xlu0 %1087
  %v1090 = vmul.f32 %v866, %v933
  %v1091 = vmul.f32 %v867, %v938
  %v1092 = vmul.f32 %v868, %v943
  %v1093 = vmul.f32 %v869, %v948
  %v1094 = vmul.f32 %v870, %v953
  %v1095 = vmul.f32 %v871, %v958
  %v1096 = vmul.f32 %v872, %v963
  %v1097 = vmul.f32 %v873, %v968
  %v1098 = vmul.f32 %v874, %v973
  %v1099 = vmul.f32 %v875, %v978
  %v1100 = vmul.f32 %v876, %v983
  %v1101 = vmul.f32 %v877, %v988
  %v1102 = vmul.f32 %v878, %v993
  %v1103 = vmul.f32 %v879, %v998
  %v1104 = vmul.f32 %v880, %v1003
  %v1105 = vmul.f32 %v881, %v1008
  %v1106 = vmul.f32 %v882, %v1013
  %v1107 = vmul.f32 %v883, %v1018
  %v1108 = vmul.f32 %v884, %v1023
  %v1109 = vmul.f32 %v885, %v1028
  %v1110 = vmul.f32 %v886, %v1033
  %v1111 = vmul.f32 %v887, %v1038
  %v1112 = vmul.f32 %v888, %v1043
  %v1113 = vmul.f32 %v889, %v1048
  %v1114 = vmul.f32 %v890, %v1053
  %v1115 = vmul.f32 %v891, %v1058
  %v1116 = vmul.f32 %v892, %v1063
  %v1117 = vmul.f32 %v893, %v1068
  %v1118 = vmul.f32 %v894, %v1073
  %v1119 = vmul.f32 %v895, %v1078
  %v1120 = vmul.f32 %v896, %v1083
  %v1121 = vmul.f32 %v897, %v1088
  %v1122 = vadd.f32 %v1090, %v1091
  %v1123 = vadd.f32 %v1122, %v1092
  %v1124 = vadd.f32 %v1123, %v1093
  %v1125 = vadd.f32 %v1124, %v1094
  %v1126 = vadd.f32 %v1125, %v1095
  %v1127 = vadd.f32 %v1126, %v1096
  %v1128 = vadd.f32 %v1127, %v1097
  %v1129 = vadd.f32 %v1128, %v1098
  %v1130 = vadd.f32 %v1129, %v1099
  %v1131 = vadd.f32 %v1130, %v1100
  %v1132 = vadd.f32 %v1131, %v1101
  %v1133 = vadd.f32 %v1132, %v1102
  %v1134 = vadd.f32 %v1133, %v1103
  %v1135 = vadd.f32 %v1134, %v1104
  %v1136 = vadd.f32 %v1135, %v1105
  %v1137 = vadd.f32 %v1136, %v1106
  %v1138 = vadd.f32 %v1137, %v1107
  %v1139 = vadd.f32 %v1138, %v1108
  %v1140 = vadd.f32 %v1139, %v1109
  %v1141 = vadd.f32 %v1140, %v1110
  %v1142 = vadd.f32 %v1141, %v1111
  %v1143 = vadd.f32 %v1142, %v1112
  %v1144 = vadd.f32 %v1143, %v1113
  %v1145 = vadd.f32 %v1144, %v1114
  %v1146 = vadd.f32 %v1145, %v1115
  %v1147 = vadd.f32 %v1146, %v1116
  %v1148 = vadd.f32 %v1147, %v1117
  %v1149 = vadd.f32 %v1148, %v1118
  %v1150 = vadd.f32 %v1149, %v1119
  %v1151 = vadd.f32 %v1150, %v1120
  %v1152 = vadd.f32 %v1151, %v1121
  %v1153 = vrot.slane %v1152, 4
  %v1154 = vadd.f32 %v1152, %v1153
  %v1155 = vrot.slane %v1154, 2
  %v1156 = vadd.f32 %v1154, %v1155
  %v1157 = vrot.slane %v1156, 1
  %v1158 = vadd.f32 %v1156, %v1157
  %s1159 = sld [smem:[#allocation2]]
  %v1160 = vstv %s1159
  %v1161 = vadd.f32 %v1158, %v1160
  %v1162 = vtanh.pop %v1161
  %v1163 = vmax.f32 %v1161, 0.0
  %vm1164 = vcmp.ne.f32.partialorder %v1161, %v1161
  %v1165 = vadd.f32 %v1161, 0.0
  %v1166 = vand.u32 2147483647, %v1161
  %v1167 = vsub.f32 0.0, %v1166
  %v1168 = vmul.f32 %v1167, 1.442695
  %v1169 = vpow.pop %v1168
  %v1170 = vadd.f32 %v1169, 1.0
  %v1171 = vlog2.pop %v1170
  %v1172 = vmul.f32 %v1171, 0.6931472
  %v1173 = vmul.f32 -0.5, %v1169
  %v1174 = vadd.f32 %v1173, 1.0
  %v1175 = vmul.f32 %v1174, %v1169
  %v1176 = vand.u32 2147483647, %v1169
  %vm1177 = vcmp.lt.f32.partialorder %v1176, 0.0004427343
  %v1178 = vsel %vm1177, %v1175, %v1172
  %v1179 = vadd.f32 %v1163, %v1178
  %v1180 = vsel %vm1164, %v1165, %v1179
  %1181 = vst [vmem:[%s5] sm:$0x1] %v1162
  %1182 = vst [vmem:[%s5 + $0x1] sm:$0x1] %v1180
  // Predicated region
  $region22: #{policy_net_forward.1} parent=0 // pred_check
    _
  $region23: #{policy_net_forward.1} parent=0 // pred_check_branch
    %1184 = sbr.rel (0) target = $region25
  $region24: #{policy_net_forward.1} parent=0 // pred_region
    _
  $region25: #{policy_net_forward.1} parent=0 // pred_fallthru
    _
  // Predicated region
  $region26: #{policy_net_forward.1} parent=0 // pred_check
    _
  $region27: #{policy_net_forward.1} parent=0 // pred_check_branch
    %1186 = sbr.rel (0) target = $region29
  $region28: #{policy_net_forward.1} parent=0 // pred_region
    _
  $region29: #{policy_net_forward.1} parent=0 // pred_fallthru
    _

</llo_original>
